<compile_context>
chip_gen: v6e
topology: v6e:2x2x1
jax: 0.10.0
libtpu: 0.0.40
codegen_flags: <defaults>
</compile_context>

<pallas_src>
import jax
import jax.numpy as jnp
from jax.experimental import pallas as pl
from jax.experimental.pallas import tpu as pltpu


def _round_up(v, m):
    return (v + m - 1) // m * m


def _padded_channels(params, c_in0):
    """Pad max channel count +1 (for the constant-1 bias channel) to 128."""
    dims = [c_in0] + [p[0].shape[1] for p in params]
    return _round_up(max(dims) + 1, 128)


# ---------------------------------------------------------------------------
# Kernel: one grid step == one SAGEConv layer (BN/bias folded, optional ReLU)
# ---------------------------------------------------------------------------
def _fused_sage_kernel(a_hbm, x_hbm, wl_ref, wr_ref, o_ref,
                       a_vmem, h_ref, sem):
    layer = pl.program_id(0)
    last = pl.num_programs(0) - 1

    @pl.when(layer == 0)
    def _():
        # One-time DMAs: resident A -> VMEM scratch, x -> carried activation.
        a_cp = pltpu.make_async_copy(a_hbm, a_vmem, sem.at[0])
        x_cp = pltpu.make_async_copy(x_hbm, h_ref, sem.at[1])
        a_cp.start()
        x_cp.start()
        x_cp.wait()
        a_cp.wait()

    h = h_ref[...]                                             # (N, C) bf16
    # Two projection matmuls (f32 accumulation on the MXU). Wr carries the
    # folded bias/BN shift on the constant-1 bias channel of h.
    proj_l = jnp.dot(h, wl_ref[...], preferred_element_type=jnp.float32)
    proj_r = jnp.dot(h, wr_ref[...], preferred_element_type=jnp.float32)
    # Neighbor-mean aggregation on the projected features:
    #   A @ (h @ Wl) == (A @ h) @ Wl   (row-normalized A, linearity)
    agg = jnp.dot(a_vmem[...], proj_l.astype(jnp.bfloat16),
                  preferred_element_type=jnp.float32)
    out = agg + proj_r                                         # f32

    @pl.when(layer < last)
    def _():                                                   # hidden layers
        # ReLU in f32 (no bf16 VPU math on v5e), cast only at the store.
        h_ref[...] = jnp.maximum(out, 0.0).astype(h_ref.dtype)
        # F.dropout(training=False) -> identity

    @pl.when(layer == last)
    def _():                                                   # final layer
        o_ref[...] = out.astype(o_ref.dtype)                   # bf16 writeback


# ---------------------------------------------------------------------------
# Host-side parameter folding (constants, done once)
# ---------------------------------------------------------------------------
def _fold_params(params, num_layers, c_pad, no_batch_norm):
    """Fold eval-mode BN scale/shift + conv bias into padded Wl / Wr stacks.

    The additive term (b*scale + shift) is placed on the Wr row indexed by
    the constant-1 bias channel (last padded column), which also propagates
    itself (Wr[bias, bias] = 1) so ReLU keeps it at 1.0 between layers.
    """
    eps = 1e-5
    bias_col = c_pad - 1
    wl_list, wr_list = [], []
    for i, (w_l, w_r, b, gamma, beta, rm, rv) in enumerate(params):
        c_in, c_out = w_l.shape
        b = jnp.reshape(jnp.asarray(b, jnp.float32), (-1,))
        assert b.shape == (c_out,), f"bias shape mismatch: {b.shape}"
        if i == num_layers - 1 or no_batch_norm:
            scale = jnp.ones((c_out,), jnp.float32)
            shift = jnp.zeros((c_out,), jnp.float32)
        else:
            scale = gamma / jnp.sqrt(rv + eps)
            shift = beta - rm * scale
        wl = jnp.zeros((c_pad, c_pad), jnp.float32).at[:c_in, :c_out].set(
            w_l * scale[None, :])
        wr = jnp.zeros((c_pad, c_pad), jnp.float32).at[:c_in, :c_out].set(
            w_r * scale[None, :])
        wr = wr.at[bias_col, :c_out].set(b * scale + shift)   # additive term
        wr = wr.at[bias_col, bias_col].set(1.0)               # keep bias col == 1
        wl_list.append(wl)
        wr_list.append(wr)
    return (jnp.stack(wl_list).astype(jnp.bfloat16),          # (L, c_pad, c_pad)
            jnp.stack(wr_list).astype(jnp.bfloat16))           # (L, c_pad, c_pad)


def _pad_inputs(x, c_pad):
    n, c_in0 = x.shape
    x_pad = jnp.zeros((n, c_pad), jnp.bfloat16)
    x_pad = x_pad.at[:, :c_in0].set(x.astype(jnp.bfloat16))
    x_pad = x_pad.at[:, c_pad - 1].set(jnp.bfloat16(1.0))     # bias channel
    return x_pad


# ---------------------------------------------------------------------------
# Wrapper: full Sage.forward in ONE pallas_call
# ---------------------------------------------------------------------------
def sage_forward(x, a, params, *, no_batch_norm=False):
    num_layers = len(params)
    n, c_in0 = x.shape
    c_out_final = params[-1][0].shape[1]
    c_pad = _padded_channels(params, c_in0)

    wl_stack, wr_stack = _fold_params(params, num_layers, c_pad, no_batch_norm)
    x_pad = _pad_inputs(x, c_pad)
    a_bf = a.astype(jnp.bfloat16)

    # Explicit VMEM budget: resident A + carried h + double-buffered weight
    # slabs + double-buffered bf16 output block + f32 temporaries + slack,
    # clamped to the chip's physical VMEM.
    need = (n * n * 2                      # resident bf16 A (single copy)
            + n * c_pad * 2                # carried activation scratch
            + 2 * n * c_pad * 2            # double-buffered bf16 output block
            + 2 * 2 * c_pad * c_pad * 2    # double-buffered Wl, Wr slabs
            + 4 * n * c_pad * 4            # f32 proj_l / proj_r / agg / out
            + (2 << 20))                   # slack
    try:
        cap = int(pltpu.get_tpu_info().vmem_capacity_bytes)
    except Exception:
        cap = 64 << 20                     # conservative (v7x) fallback
    vmem_limit = int(min(max(need, 32 << 20), max(cap - (2 << 20), 32 << 20)))

    out = pl.pallas_call(
        _fused_sage_kernel,
        out_shape=jax.ShapeDtypeStruct((n, c_pad), jnp.bfloat16),
        grid_spec=pltpu.PrefetchScalarGridSpec(
            num_scalar_prefetch=0,
            grid=(num_layers,),
            in_specs=[
                # A: left in HBM, manually DMA'd once into a single VMEM copy
                pl.BlockSpec(memory_space=pl.ANY),
                # x: left in HBM, DMA'd straight into the activation scratch
                pl.BlockSpec(memory_space=pl.ANY),
                # per-layer Wl / Wr, streamed + double-buffered (overlap DMA)
                pl.BlockSpec((None, c_pad, c_pad), lambda l: (l, 0, 0)),
                pl.BlockSpec((None, c_pad, c_pad), lambda l: (l, 0, 0)),
            ],
            out_specs=pl.BlockSpec((n, c_pad), lambda l: (0, 0)),
            scratch_shapes=[
                pltpu.VMEM((n, n), jnp.bfloat16),       # resident adjacency
                pltpu.VMEM((n, c_pad), jnp.bfloat16),   # carried activation h
                pltpu.SemaphoreType.DMA((2,)),          # A / x copy sems
            ],
        ),
        compiler_params=pltpu.CompilerParams(
            # the layer axis carries the activation scratch -> sequential
            dimension_semantics=("arbitrary",),
            vmem_limit_bytes=vmem_limit),
    )(a_bf, x_pad, wl_stack, wr_stack)
    return out[:, :c_out_final].astype(jnp.float32)


# ---------------------------------------------------------------------------
# Pure-JAX references
# ---------------------------------------------------------------------------
def _mirrored_reference(x, a, params, no_batch_norm=False):
    """Reference with the same bf16/f32 numerics & folding as the kernel."""
    num_layers = len(params)
    n, c_in0 = x.shape
    c_out_final = params[-1][0].shape[1]
    c_pad = _padded_channels(params, c_in0)
    wl_stack, wr_stack = _fold_params(params, num_layers, c_pad, no_batch_norm)
    a_bf = a.astype(jnp.bfloat16)
    h = _pad_inputs(x, c_pad)
    out = None
    for i in range(num_layers):
        proj_l = jnp.dot(h, wl_stack[i], preferred_element_type=jnp.float32)
        proj_r = jnp.dot(h, wr_stack[i], preferred_element_type=jnp.float32)
        agg = jnp.dot(a_bf, proj_l.astype(jnp.bfloat16),
                      preferred_element_type=jnp.float32)
        out = agg + proj_r
        if i < num_layers - 1:
            h = jnp.maximum(out, 0.0).astype(jnp.bfloat16)
    out_bf = out.astype(jnp.bfloat16)
    return out_bf[:, :c_out_final].astype(jnp.float32)


def _f32_reference(x, a, params):
    """Plain f32 eval-mode semantics of the PyTorch module."""
    h = x
    for i in range(len(params) - 1):
        w_l, w_r, b, gamma, beta, rm, rv = params[i]
        z = (a @ h) @ w_l + h @ w_r + b
        z = (z - rm) / jnp.sqrt(rv + 1e-5) * gamma + beta
        h = jnp.maximum(z, 0.0)
    w_l, w_r, b, *_ = params[-1]
    return (a @ h) @ w_l + h @ w_r + b


# ---------------------------------------------------------------------------
# Deterministic synthetic inputs / params
# ---------------------------------------------------------------------------
def _init_params(key, in_channels, hidden_channels, out_channels, num_layers):
    dims = ([in_channels] + [hidden_channels] * (num_layers - 1)
            + [out_channels])
    params = []
    for i in range(num_layers):
        c_in, c_out = dims[i], dims[i + 1]
        key, k1, k2, kb = jax.random.split(key, 4)
        s = 1.0 / jnp.sqrt(jnp.float32(c_in))
        w_l = jax.random.uniform(k1, (c_in, c_out), jnp.float32, -s, s)
        w_r = jax.random.uniform(k2, (c_in, c_out), jnp.float32, -s, s)
        b = jax.random.uniform(kb, (1, c_out), jnp.float32, -s, s)
        key, kg, kbeta, krv = jax.random.split(key, 4)
        gamma = 1.0 + 0.1 * jax.random.normal(kg, (c_out,), jnp.float32)
        beta = 0.1 * jax.random.normal(kbeta, (c_out,), jnp.float32)
        run_mean = jnp.zeros((c_out,), jnp.float32)
        run_var = jnp.ones((c_out,), jnp.float32) + \
            0.05 * jax.random.uniform(krv, (c_out,), jnp.float32)
        params.append((w_l, w_r, b, gamma, beta, run_mean, run_var))
    return params


def _build_adjacency(key, n):
    """Dense row-normalized adjacency (mean-aggregation operator)."""
    logits = jax.random.uniform(key, (n, n), jnp.float32)
    adj = (logits < 0.25).astype(jnp.float32)
    adj = adj * (1.0 - jnp.eye(n, dtype=jnp.float32))     # no self loops
    deg = jnp.sum(adj, axis=1, keepdims=True)
    return adj / jnp.maximum(deg, 1.0)


if __name__ == "__main__":
    key = jax.random.PRNGKey(0)
    N = 128                      # num graph nodes
    IN_C, HID_C, OUT_C = 16, 32, 8
    NUM_LAYERS = 3

    k_x, k_a, k_p = jax.random.split(key, 3)
    x = jax.random.normal(k_x, (N, IN_C), jnp.float32)
    a = _build_adjacency(k_a, N)
    params = _init_params(k_p, IN_C, HID_C, OUT_C, NUM_LAYERS)

    out = sage_forward(x, a, params, no_batch_norm=False)
    out = jax.block_until_ready(out)
    assert out.shape == (N, OUT_C)

    # exact check vs a reference that mirrors the kernel's numerics (bf16 out)
    ref_exact = _mirrored_reference(x, a, params)
    assert jnp.allclose(out, ref_exact, atol=1e-2, rtol=1e-2), float(
        jnp.max(jnp.abs(out - ref_exact)))

    # semantic check vs the plain f32 eval-mode module (bf16 rounding slack)
    ref_f32 = _f32_reference(x, a, params)
    assert jnp.allclose(out, ref_f32, atol=1e-1, rtol=1e-1), float(
        jnp.max(jnp.abs(out - ref_f32)))

    print("KERNEL_OK")
</pallas_src>

<mosaic_0001>
module attributes {stable_mosaic.version = 11 : i64} {
  func.func @_fused_sage_kernel(%arg0: i32, %arg1: memref<128x128xbf16, #tpu.memory_space<any>>, %arg2: memref<128x128xbf16, #tpu.memory_space<any>>, %arg3: memref<1x128x128xbf16, #tpu.memory_space<vmem>>, %arg4: memref<1x128x128xbf16, #tpu.memory_space<vmem>>, %arg5: memref<128x128xbf16, #tpu.memory_space<vmem>>, %arg6: memref<128x128xbf16, #tpu.memory_space<vmem>>, %arg7: memref<128x128xbf16, #tpu.memory_space<vmem>>, %arg8: memref<2x!tpu.dma_semaphore, #tpu.memory_space<semaphore_mem>>) attributes {dimension_semantics = [#tpu.dimension_semantics<arbitrary>], iteration_bounds = array<i64: 3>, scalar_prefetch = 0 : i64, scratch_operands = 3 : i64, tpu.core_type = #tpu.core_type<tc>, window_params = [{}, {}, {transform_indices = @transform_2, window_bounds = array<i64: 1, 128, 128>}, {transform_indices = @transform_3, window_bounds = array<i64: 1, 128, 128>}, {pipeline_mode = #tpu.pipeline_mode<synchronous>, transform_indices = @transform_4, window_bounds = array<i64: 128, 128>}]} {
    %c0_i32 = arith.constant 0 : i32
    %0 = arith.cmpi eq, %arg0, %c0_i32 : i32
    %1 = arith.extui %0 : i1 to i32
    %c0_i32_0 = arith.constant 0 : i32
    %2 = arith.cmpi ne, %1, %c0_i32_0 : i32
    scf.if %2 {
      %c0_i32_15 = arith.constant 0 : i32
      %20 = tpu.memref_slice %arg8[%c0_i32_15] : memref<2x!tpu.dma_semaphore, #tpu.memory_space<semaphore_mem>> -> memref<1x!tpu.dma_semaphore, #tpu.memory_space<semaphore_mem>>
      %21 = tpu.memref_squeeze %20 : memref<1x!tpu.dma_semaphore, #tpu.memory_space<semaphore_mem>> -> memref<!tpu.dma_semaphore, #tpu.memory_space<semaphore_mem>>
      tpu.enqueue_dma source(%arg1 : memref<128x128xbf16, #tpu.memory_space<any>>) target(%arg6 : memref<128x128xbf16, #tpu.memory_space<vmem>>) target_semaphore(%21 : memref<!tpu.dma_semaphore, #tpu.memory_space<semaphore_mem>>)
      %c1_i32 = arith.constant 1 : i32
      %22 = tpu.memref_slice %arg8[%c1_i32] : memref<2x!tpu.dma_semaphore, #tpu.memory_space<semaphore_mem>> -> memref<1x!tpu.dma_semaphore, #tpu.memory_space<semaphore_mem>>
      %23 = tpu.memref_squeeze %22 : memref<1x!tpu.dma_semaphore, #tpu.memory_space<semaphore_mem>> -> memref<!tpu.dma_semaphore, #tpu.memory_space<semaphore_mem>>
      tpu.enqueue_dma source(%arg2 : memref<128x128xbf16, #tpu.memory_space<any>>) target(%arg7 : memref<128x128xbf16, #tpu.memory_space<vmem>>) target_semaphore(%23 : memref<!tpu.dma_semaphore, #tpu.memory_space<semaphore_mem>>)
      %c1_i32_16 = arith.constant 1 : i32
      %24 = tpu.memref_slice %arg8[%c1_i32_16] : memref<2x!tpu.dma_semaphore, #tpu.memory_space<semaphore_mem>> -> memref<1x!tpu.dma_semaphore, #tpu.memory_space<semaphore_mem>>
      %25 = tpu.memref_squeeze %24 : memref<1x!tpu.dma_semaphore, #tpu.memory_space<semaphore_mem>> -> memref<!tpu.dma_semaphore, #tpu.memory_space<semaphore_mem>>
      tpu.wait_dma2 semaphore(%25 : memref<!tpu.dma_semaphore, #tpu.memory_space<semaphore_mem>>) src(%arg2 : memref<128x128xbf16, #tpu.memory_space<any>>) dst(%arg7 : memref<128x128xbf16, #tpu.memory_space<vmem>>)
      %c0_i32_17 = arith.constant 0 : i32
      %26 = tpu.memref_slice %arg8[%c0_i32_17] : memref<2x!tpu.dma_semaphore, #tpu.memory_space<semaphore_mem>> -> memref<1x!tpu.dma_semaphore, #tpu.memory_space<semaphore_mem>>
      %27 = tpu.memref_squeeze %26 : memref<1x!tpu.dma_semaphore, #tpu.memory_space<semaphore_mem>> -> memref<!tpu.dma_semaphore, #tpu.memory_space<semaphore_mem>>
      tpu.wait_dma2 semaphore(%27 : memref<!tpu.dma_semaphore, #tpu.memory_space<semaphore_mem>>) src(%arg1 : memref<128x128xbf16, #tpu.memory_space<any>>) dst(%arg6 : memref<128x128xbf16, #tpu.memory_space<vmem>>)
    } else {
    }
    %c0 = arith.constant 0 : index
    %c0_1 = arith.constant 0 : index
    %3 = vector.load %arg7[%c0, %c0_1] : memref<128x128xbf16, #tpu.memory_space<vmem>>, vector<128x128xbf16>
    %c0_2 = arith.constant 0 : index
    %c0_3 = arith.constant 0 : index
    %c0_4 = arith.constant 0 : index
    %4 = vector.load %arg3[%c0_2, %c0_3, %c0_4] : memref<1x128x128xbf16, #tpu.memory_space<vmem>>, vector<1x128x128xbf16>
    %5 = vector.shape_cast %4 : vector<1x128x128xbf16> to vector<128x128xbf16>
    %cst = arith.constant dense<0.000000e+00> : vector<128x128xf32>
    %6 = tpu.matmul %3, %5, %cst {dimension_numbers = #tpu.dot_dimension_numbers<[1], [0], [0], [1], [0, 0, 1, 1], [], []>} : vector<128x128xbf16>, vector<128x128xbf16>, vector<128x128xf32> -> vector<128x128xf32>
    %c0_5 = arith.constant 0 : index
    %c0_6 = arith.constant 0 : index
    %c0_7 = arith.constant 0 : index
    %7 = vector.load %arg4[%c0_5, %c0_6, %c0_7] : memref<1x128x128xbf16, #tpu.memory_space<vmem>>, vector<1x128x128xbf16>
    %8 = vector.shape_cast %7 : vector<1x128x128xbf16> to vector<128x128xbf16>
    %cst_8 = arith.constant dense<0.000000e+00> : vector<128x128xf32>
    %9 = tpu.matmul %3, %8, %cst_8 {dimension_numbers = #tpu.dot_dimension_numbers<[1], [0], [0], [1], [0, 0, 1, 1], [], []>} : vector<128x128xbf16>, vector<128x128xbf16>, vector<128x128xf32> -> vector<128x128xf32>
    %c0_9 = arith.constant 0 : index
    %c0_10 = arith.constant 0 : index
    %10 = vector.load %arg6[%c0_9, %c0_10] : memref<128x128xbf16, #tpu.memory_space<vmem>>, vector<128x128xbf16>
    %11 = arith.truncf %6 : vector<128x128xf32> to vector<128x128xbf16>
    %cst_11 = arith.constant dense<0.000000e+00> : vector<128x128xf32>
    %12 = tpu.matmul %10, %11, %cst_11 {dimension_numbers = #tpu.dot_dimension_numbers<[1], [0], [0], [1], [0, 0, 1, 1], [], []>} : vector<128x128xbf16>, vector<128x128xbf16>, vector<128x128xf32> -> vector<128x128xf32>
    %13 = arith.addf %12, %9 : vector<128x128xf32>
    %c2_i32 = arith.constant 2 : i32
    %14 = arith.cmpi slt, %arg0, %c2_i32 : i32
    %15 = arith.extui %14 : i1 to i32
    %c0_i32_12 = arith.constant 0 : i32
    %16 = arith.cmpi ne, %15, %c0_i32_12 : i32
    scf.if %16 {
      %cst_15 = arith.constant 0.000000e+00 : f32
      %20 = vector.broadcast %cst_15 : f32 to vector<128x128xf32>
      %21 = arith.maximumf %13, %20 : vector<128x128xf32>
      %22 = arith.truncf %21 : vector<128x128xf32> to vector<128x128xbf16>
      %c0_16 = arith.constant 0 : index
      %c0_17 = arith.constant 0 : index
      %23 = vector.load %arg7[%c0_16, %c0_17] : memref<128x128xbf16, #tpu.memory_space<vmem>>, vector<128x128xbf16>
      tpu.vector_store %arg7[%c0_16, %c0_17], %22 {strides = array<i32>} : memref<128x128xbf16, #tpu.memory_space<vmem>>, vector<128x128xbf16>,
    } else {
    }
    %c2_i32_13 = arith.constant 2 : i32
    %17 = arith.cmpi eq, %arg0, %c2_i32_13 : i32
    %18 = arith.extui %17 : i1 to i32
    %c0_i32_14 = arith.constant 0 : i32
    %19 = arith.cmpi ne, %18, %c0_i32_14 : i32
    scf.if %19 {
      %20 = arith.truncf %13 : vector<128x128xf32> to vector<128x128xbf16>
      %c0_15 = arith.constant 0 : index
      %c0_16 = arith.constant 0 : index
      %21 = vector.load %arg5[%c0_15, %c0_16] : memref<128x128xbf16, #tpu.memory_space<vmem>>, vector<128x128xbf16>
      tpu.vector_store %arg5[%c0_15, %c0_16], %20 {strides = array<i32>} : memref<128x128xbf16, #tpu.memory_space<vmem>>, vector<128x128xbf16>,
    } else {
    }
    return
  }
  func.func @transform_2(%arg0: i32) -> (i32, i32, i32) {
    %c0_i32 = arith.constant 0 : i32
    %c0_i32_0 = arith.constant 0 : i32
    %c0_i32_1 = arith.constant 0 : i32
    return %arg0, %c0_i32, %c0_i32_0 : i32, i32, i32
  }
  func.func @transform_3(%arg0: i32) -> (i32, i32, i32) {
    %c0_i32 = arith.constant 0 : i32
    %c0_i32_0 = arith.constant 0 : i32
    %c0_i32_1 = arith.constant 0 : i32
    return %arg0, %c0_i32, %c0_i32_0 : i32, i32, i32
  }
  func.func @transform_4(%arg0: i32) -> (i32, i32) {
    %c0_i32 = arith.constant 0 : i32
    %c0_i32_0 = arith.constant 0 : i32
    %c0_i32_1 = arith.constant 0 : i32
    return %c0_i32, %c0_i32_0 : i32, i32
  }
}

</mosaic_0001>

<llo_original>
// kernel: tpu_custom_call.1
$region0: #{tpu_custom_call.1}
  #allocation0 [shape = 'u32[]', space=smem, size = 0x4, offset = 0x4, fixed_abs, tag = 'smem constant byte address 0x4 - core index']
  #allocation1 [shape = 'u32[144,128]{1,0:T(1,128)}', space=vmem, size = 0x12000, scoped, tag = 'internal scratch']
  #allocation2 [shape = 'bf16[128,128]{1,0:T(8,128)(2,1)}', space=vmem, size = 0x8000, scoped, tag = 'scratch operand']
  #allocation3 [shape = 'bf16[128,128]{1,0:T(8,128)(2,1)}', space=vmem, size = 0x8000, scoped, tag = 'scratch operand']
  #allocation4 [shape = 's32[2]{0}', space=sflag, size = 0x8, scoped, tag = 'scratch operand']
  #allocation11 [shape = 's32[]', space=sflag, size = 0x4, offset = 0, fixed_abs, tag = 'sflag constant byte address 0x0 - dummy sync flag']
  #allocation12 [shape = 's32[]', space=sflag, size = 0x4, offset = 0, fixed_abs, tag = 'sflag constant byte address 0x0 - dummy sync flag']
  #allocation13 [shape = 'u32[]', space=smem, size = 0x4, offset = 0x44, fixed_abs, tag = 'smem constant byte address 0x44 - assertion arg 0']
  #allocation14 [shape = 'u32[]', space=smem, size = 0x4, offset = 0x48, fixed_abs, tag = 'smem constant byte address 0x48 - assertion arg 1']
  #allocation15 [shape = 's32[]', space=sflag, size = 0x4, offset = 0, fixed_abs, tag = 'sflag constant byte address 0x0 - dummy sync flag']
  #allocation16 [shape = 's32[]', space=sflag, size = 0x4, offset = 0, fixed_abs, tag = 'sflag constant byte address 0x0 - dummy sync flag']
  %s0 = inlined_call_operand.hbm [shape: bf16[128,128], index: 0, kind: input, shape index: {}]
  %s1 = inlined_call_operand.hbm [shape: bf16[128,128], index: 1, kind: input, shape index: {}]
  %s2 = inlined_call_operand.hbm [shape: bf16[3,128,128], index: 2, kind: input, shape index: {}]
  %s3 = inlined_call_operand.hbm [shape: bf16[3,128,128], index: 3, kind: input, shape index: {}]
  %s4 = inlined_call_operand.hbm [shape: bf16[128,128], index: 4, kind: output, shape index: {}]
  %s5 = sld [smem:[#allocation0]]
  $region69: #{tpu_custom_call.1} parent=0
    _
  %s7 = ssub.s32 1, %s5
  %s8 = scalar_select 0, %s7, %s5
  $region1: #{tpu_custom_call.1} parent=0
    #allocation5 [shape = 'u8[65536]{0}', space=vmem, size = 0x10000, scoped, tag = 'input window, operand 2']
    #allocation6 [shape = 's32[2]{0}', space=sflag, size = 0x8, scoped, tag = 'scoped memory for tpu_custom_call.1']
    #allocation7 [shape = 's32[2]{0}', space=sflag, size = 0x8, scoped, tag = 'scoped memory for tpu_custom_call.1']
    #allocation8 [shape = 'u8[65536]{0}', space=vmem, size = 0x10000, scoped, tag = 'input window, operand 3']
    #allocation9 [shape = 's32[2]{0}', space=sflag, size = 0x8, scoped, tag = 'scoped memory for tpu_custom_call.1']
    #allocation10 [shape = 'u8[32768]{0}', space=vmem, size = 0x8000, scoped, tag = 'output window, operand 0, single buffered']
    %9 = vsyncpa [#allocation6], 0
    %s10 = scalar_lea.sflag [#allocation6], 1
    %11 = vsyncpa %s10, 0
    %12 = vsyncpa [#allocation9], 0
    %s13 = scalar_lea.sflag [#allocation9], 1
    %14 = vsyncpa %s13, 0
    %15 = vsyncpa [#allocation7], 0
    loop: start=0, step=1, limit=5
    $region2: #{tpu_custom_call.1} parent=1 // loop_pre_header
      _
    $region3: #{tpu_custom_call.1} parent=1 // loop_header
      %s17 = sphi 0, %s21
      %p18 = scmp.ge.s32.totalorder %s17, 5
      %s27 = sphi 0, %s29
      %s30 = sphi 0, %s27
      %s31 = sphi 0, %s30
      %s47 = sphi 0, %s31
      %s53 = sphi 0, %s55
      %s56 = sphi 0, %s53
      %s57 = sphi 0, %s56
      %s73 = sphi 0, %s57
      %s77 = sphi 0, %s77
      %s79 = sphi 0, %s77
      %s80 = sphi 0, %s79
      %s94 = sphi 0, %s80
    $region4: #{tpu_custom_call.1} parent=1 // loop_header_branch
      %20 = sbr.rel (%p18) target = $region8
    $region5: #{tpu_custom_call.1} parent=1 // loop_body
      %s22 = ssub.s32 %s17, 1
      %s23 = ssub.s32 %s17, 2
      %s24 = sadd.s32 %s17, 1
      %s25 = ssub.s32 %s17, %s24
      %p26 = scmp.eq.s32.totalorder %s25, 0
      %s28 = sadd.s32 %s27, 1
      %s29 = scalar_select %p26, %s27, %s28
      %p32 = pneg %p26
      %p33 = scmp.eq.s32.totalorder %s17, 2
      %p34 = por %p32, %p33
      %p35 = scmp.ne.s32.totalorder %s27, %s30
      %p36 = scmp.eq.s32.totalorder %s17, 0
      %p37 = por %p35, %p36
      %p38 = scmp.ne.s32.totalorder %s27, %s30
      %p39 = scmp.eq.s32.totalorder %s22, 2
      %p40 = por %p38, %p39
      %p41 = scmp.ne.s32.totalorder %s30, %s31
      %p42 = scmp.eq.s32.totalorder %s22, 0
      %p43 = por %p41, %p42
      %p44 = scmp.ne.s32.totalorder %s30, %s31
      %p45 = scmp.eq.s32.totalorder %s23, 2
      %p46 = por %p44, %p45
      %p48 = scmp.ne.s32.totalorder %s31, %s47
      %p49 = scmp.eq.s32.totalorder %s23, 0
      %p50 = por %p48, %p49
      %s51 = ssub.s32 %s17, %s24
      %p52 = scmp.eq.s32.totalorder %s51, 0
      %s54 = sadd.s32 %s53, 1
      %s55 = scalar_select %p52, %s53, %s54
      %p58 = pneg %p52
      %p59 = scmp.eq.s32.totalorder %s17, 2
      %p60 = por %p58, %p59
      %p61 = scmp.ne.s32.totalorder %s53, %s56
      %p62 = scmp.eq.s32.totalorder %s17, 0
      %p63 = por %p61, %p62
      %p64 = scmp.ne.s32.totalorder %s53, %s56
      %p65 = scmp.eq.s32.totalorder %s22, 2
      %p66 = por %p64, %p65
      %p67 = scmp.ne.s32.totalorder %s56, %s57
      %p68 = scmp.eq.s32.totalorder %s22, 0
      %p69 = por %p67, %p68
      %p70 = scmp.ne.s32.totalorder %s56, %s57
      %p71 = scmp.eq.s32.totalorder %s23, 2
      %p72 = por %p70, %p71
      %p74 = scmp.ne.s32.totalorder %s57, %s73
      %p75 = scmp.eq.s32.totalorder %s23, 0
      %p76 = por %p74, %p75
      %s78 = sadd.s32 %s77, 1
      %p81 = scmp.eq.s32.totalorder %s17, 2
      %p82 = scmp.ne.s32.totalorder %s77, %s79
      %p83 = scmp.eq.s32.totalorder %s17, 0
      %p84 = por %p82, %p83
      %p85 = scmp.ne.s32.totalorder %s77, %s79
      %p86 = scmp.eq.s32.totalorder %s22, 2
      %p87 = por %p85, %p86
      %p88 = scmp.ne.s32.totalorder %s79, %s80
      %p89 = scmp.eq.s32.totalorder %s22, 0
      %p90 = por %p88, %p89
      %p91 = scmp.ne.s32.totalorder %s79, %s80
      %p92 = scmp.eq.s32.totalorder %s23, 2
      %p93 = por %p91, %p92
      %p95 = scmp.ne.s32.totalorder %s80, %s94
      %p96 = scmp.eq.s32.totalorder %s23, 0
      %p97 = por %p95, %p96
      %p98 = scmp.le.s32.totalorder 1, %s17
      %p99 = scmp.lt.s32.totalorder %s17, 4
      %p100 = pnand %p98, %p99
      %p101 = pneg %p100
      // Predicated region
      $region9: #{tpu_custom_call.1} parent=5 // pred_check
        _
      $region10: #{tpu_custom_call.1} parent=5 // pred_check_branch
        %103 = sbr.rel (%p100) target = $region12
      $region11: #{tpu_custom_call.1} parent=5 // pred_region
        %s104 = ssub.s32 %s17, 1
      $region12: #{tpu_custom_call.1} parent=5 // pred_fallthru
        _
      %p105 = scmp.lt.s32.totalorder %s17, 3
      // Predicated region
      $region13: #{tpu_custom_call.1} parent=5 // pred_check
        %p106 = pneg %p105
      $region14: #{tpu_custom_call.1} parent=5 // pred_check_branch
        %108 = sbr.rel (%p106) target = $region16
      $region15: #{tpu_custom_call.1} parent=5 // pred_region
        // Predicated region
        $region17: #{tpu_custom_call.1} parent=15 // pred_check
          %p109 = pneg %p37
        $region18: #{tpu_custom_call.1} parent=15 // pred_check_branch
          %111 = sbr.rel (%p109) target = $region20
        $region19: #{tpu_custom_call.1} parent=15 // pred_region
          %s112 = sand.u32 %s27, 1
          %s113 = scalar_lea.sflag [#allocation6], %s112
          %s114 = sand.u32 %s27, 1
          %s115 = smul.addr %s114, 64
          %s116 = scalar_lea.vmem [#allocation5], %s115
          %s118 = ssub.s32 1024, 1024
          %119 = vsyncadd %s113, %s118
          %s120 = smul.addr %s17, 16
          %s121 = smul.addr %s120, 64
          %s122 = scalar_lea.hbm %s2, %s121
          %s123 = sshll.u32 %s116, 4
          %s124 = int_to_ptr.vmem [resolvable:$true] %s123
          %129 = dma.hbm_to_vmem [thread:$0]  %s122, 1024, %s124, %s113, 64, 64, 4
        $region20: #{tpu_custom_call.1} parent=15 // pred_fallthru
          _
        // Predicated region
        $region21: #{tpu_custom_call.1} parent=15 // pred_check
          %p130 = pneg %p63
        $region22: #{tpu_custom_call.1} parent=15 // pred_check_branch
          %132 = sbr.rel (%p130) target = $region24
        $region23: #{tpu_custom_call.1} parent=15 // pred_region
          %s133 = sand.u32 %s53, 1
          %s134 = scalar_lea.sflag [#allocation9], %s133
          %s135 = sand.u32 %s53, 1
          %s136 = smul.addr %s135, 64
          %s137 = scalar_lea.vmem [#allocation8], %s136
          %s139 = ssub.s32 1024, 1024
          %140 = vsyncadd %s134, %s139
          %s141 = smul.addr %s17, 16
          %s142 = smul.addr %s141, 64
          %s143 = scalar_lea.hbm %s3, %s142
          %s144 = sshll.u32 %s137, 4
          %s145 = int_to_ptr.vmem [resolvable:$true] %s144
          %150 = dma.hbm_to_vmem [thread:$0]  %s143, 1024, %s145, %s134, 64, 64, 4
        $region24: #{tpu_custom_call.1} parent=15 // pred_fallthru
          _
      $region16: #{tpu_custom_call.1} parent=5 // pred_fallthru
        _
      %p151 = scmp.le.s32.totalorder 1, %s17
      %p152 = scmp.lt.s32.totalorder %s17, 4
      %p153 = pnand %p151, %p152
      %p154 = pneg %p153
      // Predicated region
      $region25: #{tpu_custom_call.1} parent=5 // pred_check
        _
      $region26: #{tpu_custom_call.1} parent=5 // pred_check_branch
        %156 = sbr.rel (%p153) target = $region28
      $region27: #{tpu_custom_call.1} parent=5 // pred_region
        %s157 = ssub.s32 %s17, 1
        %s158 = sand.u32 %s30, 1
        %s159 = scalar_lea.sflag [#allocation6], %s158
        %s160 = sand.u32 %s30, 1
        %s161 = smul.addr %s160, 64
        %s162 = scalar_lea.vmem [#allocation5], %s161
        // Predicated region
        $region29: #{tpu_custom_call.1} parent=27 // pred_check
          %p163 = pneg %p43
        $region30: #{tpu_custom_call.1} parent=27 // pred_check_branch
          %165 = sbr.rel (%p163) target = $region32
        $region31: #{tpu_custom_call.1} parent=27 // pred_region
          %166 = dma.done %s159, 1024
        $region32: #{tpu_custom_call.1} parent=27 // pred_fallthru
          _
        %s167 = sand.u32 %s56, 1
        %s168 = scalar_lea.sflag [#allocation9], %s167
        %s169 = sand.u32 %s56, 1
        %s170 = smul.addr %s169, 64
        %s171 = scalar_lea.vmem [#allocation8], %s170
        // Predicated region
        $region33: #{tpu_custom_call.1} parent=27 // pred_check
          %p172 = pneg %p69
        $region34: #{tpu_custom_call.1} parent=27 // pred_check_branch
          %174 = sbr.rel (%p172) target = $region36
        $region35: #{tpu_custom_call.1} parent=27 // pred_region
          %175 = dma.done %s168, 1024
        $region36: #{tpu_custom_call.1} parent=27 // pred_fallthru
          _
        %s176 = sand.u32 %s30, 1
        %s177 = scalar_lea.sflag [#allocation6], %s176
        %s178 = sand.u32 %s30, 1
        %s179 = smul.addr %s178, 64
        %s180 = scalar_lea.vmem [#allocation5], %s179
        %p181 = pneg %p43
        %p182 = pneg %p40
        %s183 = sand.u32 %s56, 1
        %s184 = scalar_lea.sflag [#allocation9], %s183
        %s185 = sand.u32 %s56, 1
        %s186 = smul.addr %s185, 64
        %s187 = scalar_lea.vmem [#allocation8], %s186
        %p188 = pneg %p69
        %p189 = pneg %p66
        %p190 = pneg %p90
        %p191 = pneg %p87
        %p193 = scmp.eq.s32.totalorder %s22, 0
        // Predicated region
        $region37: #{tpu_custom_call.1} parent=27 // pred_check
          %p194 = pneg %p193
        $region38: #{tpu_custom_call.1} parent=27 // pred_check_branch
          %196 = sbr.rel (%p194) target = $region40
        $region39: #{tpu_custom_call.1} parent=27 // pred_region
          // Predicated region
          $region41: #{tpu_custom_call.1} parent=39 // pred_check
            _
          $region42: #{tpu_custom_call.1} parent=39 // pred_check_branch
            %198 = sbr.rel target = $region44
          $region43: #{tpu_custom_call.1} parent=39 // pred_region
            %199 = sst [smem:[#allocation13]] [#allocation12]
            %200 = sst [smem:[#allocation14]] [#allocation11]
          $region44: #{tpu_custom_call.1} parent=39 // pred_fallthru
            _
          %202 = shalt.err (0)
          %s204 = sshll.u32 [#allocation2], 4
          %s205 = int_to_ptr.vmem [resolvable:$true] %s204
          %207 = dma.hbm_to_vmem [thread:$0]  %s0, 1024, %s205, [#allocation4]
          %s208 = scalar_lea.sflag [#allocation4], 1
          // Predicated region
          $region45: #{tpu_custom_call.1} parent=39 // pred_check
            _
          $region46: #{tpu_custom_call.1} parent=39 // pred_check_branch
            %210 = sbr.rel target = $region48
          $region47: #{tpu_custom_call.1} parent=39 // pred_region
            %211 = sst [smem:[#allocation13]] [#allocation16]
            %212 = sst [smem:[#allocation14]] [#allocation15]
          $region48: #{tpu_custom_call.1} parent=39 // pred_fallthru
            _
          %214 = shalt.err (0)
          %s216 = sshll.u32 [#allocation3], 4
          %s217 = int_to_ptr.vmem [resolvable:$true] %s216
          %219 = dma.hbm_to_vmem [thread:$0]  %s1, 1024, %s217, %s208
          %s220 = smul.u32 4, 16
          %s221 = smul.u32 %s220, 1
          %s222 = sshll.u32 %s221, 4
          %223 = dma.done %s208, %s222
          %s224 = sshll.u32 %s221, 4
          %225 = dma.done [#allocation4], %s224
        $region40: #{tpu_custom_call.1} parent=27 // pred_fallthru
          _
        %v226 = vld [vmem:[#allocation3] sm:$0xf]
        %v227 = vld [vmem:[#allocation3 + $0x4] sm:$0xf]
        %v228 = vld [vmem:[#allocation3 + $0x8] sm:$0xf]
        %v229 = vld [vmem:[#allocation3 + $0xc] sm:$0xf]
        %v230 = vld [vmem:[#allocation3 + $0x10] sm:$0xf]
        %v231 = vld [vmem:[#allocation3 + $0x14] sm:$0xf]
        %v232 = vld [vmem:[#allocation3 + $0x18] sm:$0xf]
        %v233 = vld [vmem:[#allocation3 + $0x1c] sm:$0xf]
        %v234 = vld [vmem:[#allocation3 + $0x20] sm:$0xf]
        %v235 = vld [vmem:[#allocation3 + $0x24] sm:$0xf]
        %v236 = vld [vmem:[#allocation3 + $0x28] sm:$0xf]
        %v237 = vld [vmem:[#allocation3 + $0x2c] sm:$0xf]
        %v238 = vld [vmem:[#allocation3 + $0x30] sm:$0xf]
        %v239 = vld [vmem:[#allocation3 + $0x34] sm:$0xf]
        %v240 = vld [vmem:[#allocation3 + $0x38] sm:$0xf]
        %v241 = vld [vmem:[#allocation3 + $0x3c] sm:$0xf]
        %v242 = vld [vmem:[%s162] sm:$0xf]
        %v243 = vld [vmem:[%s162 + $0x4] sm:$0xf]
        %v244 = vld [vmem:[%s162 + $0x8] sm:$0xf]
        %v245 = vld [vmem:[%s162 + $0xc] sm:$0xf]
        %v246 = vld [vmem:[%s162 + $0x10] sm:$0xf]
        %v247 = vld [vmem:[%s162 + $0x14] sm:$0xf]
        %v248 = vld [vmem:[%s162 + $0x18] sm:$0xf]
        %v249 = vld [vmem:[%s162 + $0x1c] sm:$0xf]
        %v250 = vld [vmem:[%s162 + $0x20] sm:$0xf]
        %v251 = vld [vmem:[%s162 + $0x24] sm:$0xf]
        %v252 = vld [vmem:[%s162 + $0x28] sm:$0xf]
        %v253 = vld [vmem:[%s162 + $0x2c] sm:$0xf]
        %v254 = vld [vmem:[%s162 + $0x30] sm:$0xf]
        %v255 = vld [vmem:[%s162 + $0x34] sm:$0xf]
        %v256 = vld [vmem:[%s162 + $0x38] sm:$0xf]
        %v257 = vld [vmem:[%s162 + $0x3c] sm:$0xf]
        %v274 = vunpack.c.l.b16 %v226
        %v275 = vunpack.c.l.b16 %v227
        %v276 = vunpack.c.l.b16 %v228
        %v277 = vunpack.c.l.b16 %v229
        %v278 = vunpack.c.l.b16 %v230
        %v279 = vunpack.c.l.b16 %v231
        %v280 = vunpack.c.l.b16 %v232
        %v281 = vunpack.c.l.b16 %v233
        %v282 = vunpack.c.l.b16 %v234
        %v283 = vunpack.c.l.b16 %v235
        %v284 = vunpack.c.l.b16 %v236
        %v285 = vunpack.c.l.b16 %v237
        %v286 = vunpack.c.l.b16 %v238
        %v287 = vunpack.c.l.b16 %v239
        %v288 = vunpack.c.l.b16 %v240
        %v289 = vunpack.c.l.b16 %v241
        %v290 = vpack.c.b16 %v275, %v274
        %v291 = vpack.c.b16 %v277, %v276
        %v292 = vpack.c.b16 %v279, %v278
        %v293 = vpack.c.b16 %v281, %v280
        %v294 = vpack.c.b16 %v283, %v282
        %v295 = vpack.c.b16 %v285, %v284
        %v296 = vpack.c.b16 %v287, %v286
        %v297 = vpack.c.b16 %v289, %v288
        %v322 = vunpack.c.l.b16 %v242
        %v323 = vunpack.c.l.b16 %v243
        %v324 = vunpack.c.l.b16 %v244
        %v325 = vunpack.c.l.b16 %v245
        %v326 = vunpack.c.l.b16 %v246
        %v327 = vunpack.c.l.b16 %v247
        %v328 = vunpack.c.l.b16 %v248
        %v329 = vunpack.c.l.b16 %v249
        %v330 = vunpack.c.l.b16 %v250
        %v331 = vunpack.c.l.b16 %v251
        %v332 = vunpack.c.l.b16 %v252
        %v333 = vunpack.c.l.b16 %v253
        %v334 = vunpack.c.l.b16 %v254
        %v335 = vunpack.c.l.b16 %v255
        %v336 = vunpack.c.l.b16 %v256
        %v337 = vunpack.c.l.b16 %v257
        %v338 = vpack.c.b16 %v323, %v322
        %v339 = vpack.c.b16 %v325, %v324
        %v340 = vpack.c.b16 %v327, %v326
        %v341 = vpack.c.b16 %v329, %v328
        %v342 = vpack.c.b16 %v331, %v330
        %v343 = vpack.c.b16 %v333, %v332
        %v344 = vpack.c.b16 %v335, %v334
        %v345 = vpack.c.b16 %v337, %v336
        %354 = vmatprep.subr.bf16.mxu0 0
        %355 = vmatpush1.bf16.msra.mxu0 %v345
        %356 = vmatprep.subr.bf16.mxu0 0
        %357 = vmatpush1.bf16.msra.mxu0 %v344
        %358 = vmatprep.subr.bf16.mxu0 0
        %359 = vmatpush1.bf16.msra.mxu0 %v343
        %360 = vmatprep.subr.bf16.mxu0 0
        %361 = vmatpush1.bf16.msra.mxu0 %v342
        %362 = vmatprep.subr.bf16.mxu0 0
        %363 = vmatpush1.bf16.msra.mxu0 %v341
        %364 = vmatprep.subr.bf16.mxu0 0
        %365 = vmatpush1.bf16.msra.mxu0 %v340
        %366 = vmatprep.subr.bf16.mxu0 0
        %367 = vmatpush1.bf16.msra.mxu0 %v339
        %368 = vmatprep.subr.bf16.mxu0 0
        %369 = vmatpush1.bf16.msra.mxu0 %v338
        %370 = vmatprep.subr.bf16.mxu0 0
        %371 = vmatpush2.bf16.msra.mxu0 0
        %372 = vmatprep.subr.bf16.mxu0 0
        %373 = vmatpush2.bf16.msra.mxu0 0
        %374 = vmatprep.subr.bf16.mxu0 0
        %375 = vmatpush2.bf16.msra.mxu0 0
        %376 = vmatprep.subr.bf16.mxu0 0
        %377 = vmatpush2.bf16.msra.mxu0 0
        %378 = vmatprep.subr.bf16.mxu0 0
        %379 = vmatpush2.bf16.msra.mxu0 0
        %380 = vmatprep.subr.bf16.mxu0 0
        %381 = vmatpush2.bf16.msra.mxu0 0
        %382 = vmatprep.subr.bf16.mxu0 0
        %383 = vmatpush2.bf16.msra.mxu0 0
        %384 = vmatprep.subr.bf16.mxu0 0
        %385 = vmatpush2.bf16.msra.mxu0 0
        %386 = vmatprep.mubr.bf16.mxu0 0
        %387 = vmatmul.mubr.bf16.gmra.mxu0 %v290
        %v388 = vpop.f32.mrf.mxu0
        %v389 = vadd.f32 0.0, %v388
        %v390 = vpop.f32.mrf.mxu0
        %v391 = vpop.f32.mrf.mxu0
        %v392 = vadd.f32 0.0, %v391
        %v393 = vpop.f32.mrf.mxu0
        %394 = vmatprep.mubr.bf16.mxu0 0
        %395 = vmatmul.mubr.bf16.gmra.mxu0 %v291
        %v396 = vpop.f32.mrf.mxu0
        %v397 = vadd.f32 0.0, %v396
        %v398 = vpop.f32.mrf.mxu0
        %v399 = vpop.f32.mrf.mxu0
        %v400 = vadd.f32 0.0, %v399
        %v401 = vpop.f32.mrf.mxu0
        %402 = vmatprep.mubr.bf16.mxu0 0
        %403 = vmatmul.mubr.bf16.gmra.mxu0 %v292
        %v404 = vpop.f32.mrf.mxu0
        %v405 = vadd.f32 0.0, %v404
        %v406 = vpop.f32.mrf.mxu0
        %v407 = vpop.f32.mrf.mxu0
        %v408 = vadd.f32 0.0, %v407
        %v409 = vpop.f32.mrf.mxu0
        %410 = vmatprep.mubr.bf16.mxu0 0
        %411 = vmatmul.mubr.bf16.gmra.mxu0 %v293
        %v412 = vpop.f32.mrf.mxu0
        %v413 = vadd.f32 0.0, %v412
        %v414 = vpop.f32.mrf.mxu0
        %v415 = vpop.f32.mrf.mxu0
        %v416 = vadd.f32 0.0, %v415
        %v417 = vpop.f32.mrf.mxu0
        %418 = vmatprep.mubr.bf16.mxu0 0
        %419 = vmatmul.mubr.bf16.gmra.mxu0 %v294
        %v420 = vpop.f32.mrf.mxu0
        %v421 = vadd.f32 0.0, %v420
        %v422 = vpop.f32.mrf.mxu0
        %v423 = vpop.f32.mrf.mxu0
        %v424 = vadd.f32 0.0, %v423
        %v425 = vpop.f32.mrf.mxu0
        %426 = vmatprep.mubr.bf16.mxu0 0
        %427 = vmatmul.mubr.bf16.gmra.mxu0 %v295
        %v428 = vpop.f32.mrf.mxu0
        %v429 = vadd.f32 0.0, %v428
        %v430 = vpop.f32.mrf.mxu0
        %v431 = vpop.f32.mrf.mxu0
        %v432 = vadd.f32 0.0, %v431
        %v433 = vpop.f32.mrf.mxu0
        %434 = vmatprep.mubr.bf16.mxu0 0
        %435 = vmatmul.mubr.bf16.gmra.mxu0 %v296
        %v436 = vpop.f32.mrf.mxu0
        %v437 = vadd.f32 0.0, %v436
        %v438 = vpop.f32.mrf.mxu0
        %v439 = vpop.f32.mrf.mxu0
        %v440 = vadd.f32 0.0, %v439
        %v441 = vpop.f32.mrf.mxu0
        %442 = vmatprep.mubr.bf16.mxu0 0
        %443 = vmatmul.mubr.bf16.gmra.mxu0 %v297
        %v444 = vpop.f32.mrf.mxu0
        %v445 = vadd.f32 0.0, %v444
        %v446 = vpop.f32.mrf.mxu0
        %v447 = vpop.f32.mrf.mxu0
        %v448 = vadd.f32 0.0, %v447
        %v449 = vpop.f32.mrf.mxu0
        %450 = vdwg.mxu0
        %v451 = vld [vmem:[%s171] sm:$0xf]
        %v452 = vld [vmem:[%s171 + $0x4] sm:$0xf]
        %v453 = vld [vmem:[%s171 + $0x8] sm:$0xf]
        %v454 = vld [vmem:[%s171 + $0xc] sm:$0xf]
        %v455 = vld [vmem:[%s171 + $0x10] sm:$0xf]
        %v456 = vld [vmem:[%s171 + $0x14] sm:$0xf]
        %v457 = vld [vmem:[%s171 + $0x18] sm:$0xf]
        %v458 = vld [vmem:[%s171 + $0x1c] sm:$0xf]
        %v459 = vld [vmem:[%s171 + $0x20] sm:$0xf]
        %v460 = vld [vmem:[%s171 + $0x24] sm:$0xf]
        %v461 = vld [vmem:[%s171 + $0x28] sm:$0xf]
        %v462 = vld [vmem:[%s171 + $0x2c] sm:$0xf]
        %v463 = vld [vmem:[%s171 + $0x30] sm:$0xf]
        %v464 = vld [vmem:[%s171 + $0x34] sm:$0xf]
        %v465 = vld [vmem:[%s171 + $0x38] sm:$0xf]
        %v466 = vld [vmem:[%s171 + $0x3c] sm:$0xf]
        %v483 = vunpack.c.l.b16 %v451
        %v484 = vunpack.c.l.b16 %v452
        %v485 = vunpack.c.l.b16 %v453
        %v486 = vunpack.c.l.b16 %v454
        %v487 = vunpack.c.l.b16 %v455
        %v488 = vunpack.c.l.b16 %v456
        %v489 = vunpack.c.l.b16 %v457
        %v490 = vunpack.c.l.b16 %v458
        %v491 = vunpack.c.l.b16 %v459
        %v492 = vunpack.c.l.b16 %v460
        %v493 = vunpack.c.l.b16 %v461
        %v494 = vunpack.c.l.b16 %v462
        %v495 = vunpack.c.l.b16 %v463
        %v496 = vunpack.c.l.b16 %v464
        %v497 = vunpack.c.l.b16 %v465
        %v498 = vunpack.c.l.b16 %v466
        %v499 = vpack.c.b16 %v484, %v483
        %v500 = vpack.c.b16 %v486, %v485
        %v501 = vpack.c.b16 %v488, %v487
        %v502 = vpack.c.b16 %v490, %v489
        %v503 = vpack.c.b16 %v492, %v491
        %v504 = vpack.c.b16 %v494, %v493
        %v505 = vpack.c.b16 %v496, %v495
        %v506 = vpack.c.b16 %v498, %v497
        %515 = vmatprep.subr.bf16.mxu0 0
        %516 = vmatpush1.bf16.msra.mxu0 %v506
        %517 = vmatprep.subr.bf16.mxu0 0
        %518 = vmatpush1.bf16.msra.mxu0 %v505
        %519 = vmatprep.subr.bf16.mxu0 0
        %520 = vmatpush1.bf16.msra.mxu0 %v504
        %521 = vmatprep.subr.bf16.mxu0 0
        %522 = vmatpush1.bf16.msra.mxu0 %v503
        %523 = vmatprep.subr.bf16.mxu0 0
        %524 = vmatpush1.bf16.msra.mxu0 %v502
        %525 = vmatprep.subr.bf16.mxu0 0
        %526 = vmatpush1.bf16.msra.mxu0 %v501
        %527 = vmatprep.subr.bf16.mxu0 0
        %528 = vmatpush1.bf16.msra.mxu0 %v500
        %529 = vmatprep.subr.bf16.mxu0 0
        %530 = vmatpush1.bf16.msra.mxu0 %v499
        %531 = vmatprep.subr.bf16.mxu0 0
        %532 = vmatpush2.bf16.msra.mxu0 0
        %533 = vmatprep.subr.bf16.mxu0 0
        %534 = vmatpush2.bf16.msra.mxu0 0
        %535 = vmatprep.subr.bf16.mxu0 0
        %536 = vmatpush2.bf16.msra.mxu0 0
        %537 = vmatprep.subr.bf16.mxu0 0
        %538 = vmatpush2.bf16.msra.mxu0 0
        %539 = vmatprep.subr.bf16.mxu0 0
        %540 = vmatpush2.bf16.msra.mxu0 0
        %541 = vmatprep.subr.bf16.mxu0 0
        %542 = vmatpush2.bf16.msra.mxu0 0
        %543 = vmatprep.subr.bf16.mxu0 0
        %544 = vmatpush2.bf16.msra.mxu0 0
        %545 = vmatprep.subr.bf16.mxu0 0
        %546 = vmatpush2.bf16.msra.mxu0 0
        %547 = vmatprep.mubr.bf16.mxu0 0
        %548 = vmatmul.mubr.bf16.gmra.mxu0 %v290
        %v549 = vpop.f32.mrf.mxu0
        %v550 = vadd.f32 0.0, %v549
        %v551 = vpop.f32.mrf.mxu0
        %v552 = vpop.f32.mrf.mxu0
        %v553 = vadd.f32 0.0, %v552
        %v554 = vpop.f32.mrf.mxu0
        %555 = vmatprep.mubr.bf16.mxu0 0
        %556 = vmatmul.mubr.bf16.gmra.mxu0 %v291
        %v557 = vpop.f32.mrf.mxu0
        %v558 = vadd.f32 0.0, %v557
        %v559 = vpop.f32.mrf.mxu0
        %v560 = vpop.f32.mrf.mxu0
        %v561 = vadd.f32 0.0, %v560
        %v562 = vpop.f32.mrf.mxu0
        %563 = vmatprep.mubr.bf16.mxu0 0
        %564 = vmatmul.mubr.bf16.gmra.mxu0 %v292
        %v565 = vpop.f32.mrf.mxu0
        %v566 = vadd.f32 0.0, %v565
        %v567 = vpop.f32.mrf.mxu0
        %v568 = vpop.f32.mrf.mxu0
        %v569 = vadd.f32 0.0, %v568
        %v570 = vpop.f32.mrf.mxu0
        %571 = vmatprep.mubr.bf16.mxu0 0
        %572 = vmatmul.mubr.bf16.gmra.mxu0 %v293
        %v573 = vpop.f32.mrf.mxu0
        %v574 = vadd.f32 0.0, %v573
        %v575 = vpop.f32.mrf.mxu0
        %v576 = vpop.f32.mrf.mxu0
        %v577 = vadd.f32 0.0, %v576
        %v578 = vpop.f32.mrf.mxu0
        %579 = vmatprep.mubr.bf16.mxu0 0
        %580 = vmatmul.mubr.bf16.gmra.mxu0 %v294
        %v581 = vpop.f32.mrf.mxu0
        %v582 = vadd.f32 0.0, %v581
        %v583 = vpop.f32.mrf.mxu0
        %v584 = vpop.f32.mrf.mxu0
        %v585 = vadd.f32 0.0, %v584
        %v586 = vpop.f32.mrf.mxu0
        %587 = vmatprep.mubr.bf16.mxu0 0
        %588 = vmatmul.mubr.bf16.gmra.mxu0 %v295
        %v589 = vpop.f32.mrf.mxu0
        %v590 = vadd.f32 0.0, %v589
        %v591 = vpop.f32.mrf.mxu0
        %v592 = vpop.f32.mrf.mxu0
        %v593 = vadd.f32 0.0, %v592
        %v594 = vpop.f32.mrf.mxu0
        %595 = vmatprep.mubr.bf16.mxu0 0
        %596 = vmatmul.mubr.bf16.gmra.mxu0 %v296
        %v597 = vpop.f32.mrf.mxu0
        %v598 = vadd.f32 0.0, %v597
        %v599 = vpop.f32.mrf.mxu0
        %v600 = vpop.f32.mrf.mxu0
        %v601 = vadd.f32 0.0, %v600
        %v602 = vpop.f32.mrf.mxu0
        %603 = vmatprep.mubr.bf16.mxu0 0
        %604 = vmatmul.mubr.bf16.gmra.mxu0 %v297
        %v605 = vpop.f32.mrf.mxu0
        %v606 = vadd.f32 0.0, %v605
        %v607 = vpop.f32.mrf.mxu0
        %v608 = vpop.f32.mrf.mxu0
        %v609 = vadd.f32 0.0, %v608
        %v610 = vpop.f32.mrf.mxu0
        %611 = vdwg.mxu0
        %v612 = vld [vmem:[#allocation2] sm:$0xf]
        %v613 = vld [vmem:[#allocation2 + $0x4] sm:$0xf]
        %v614 = vld [vmem:[#allocation2 + $0x8] sm:$0xf]
        %v615 = vld [vmem:[#allocation2 + $0xc] sm:$0xf]
        %v616 = vld [vmem:[#allocation2 + $0x10] sm:$0xf]
        %v617 = vld [vmem:[#allocation2 + $0x14] sm:$0xf]
        %v618 = vld [vmem:[#allocation2 + $0x18] sm:$0xf]
        %v619 = vld [vmem:[#allocation2 + $0x1c] sm:$0xf]
        %v620 = vld [vmem:[#allocation2 + $0x20] sm:$0xf]
        %v621 = vld [vmem:[#allocation2 + $0x24] sm:$0xf]
        %v622 = vld [vmem:[#allocation2 + $0x28] sm:$0xf]
        %v623 = vld [vmem:[#allocation2 + $0x2c] sm:$0xf]
        %v624 = vld [vmem:[#allocation2 + $0x30] sm:$0xf]
        %v625 = vld [vmem:[#allocation2 + $0x34] sm:$0xf]
        %v626 = vld [vmem:[#allocation2 + $0x38] sm:$0xf]
        %v627 = vld [vmem:[#allocation2 + $0x3c] sm:$0xf]
        %v628 = vpack.c.bf16 %v392, %v389
        %v629 = vpack.c.bf16 %v400, %v397
        %v630 = vpack.c.bf16 %v408, %v405
        %v631 = vpack.c.bf16 %v416, %v413
        %v632 = vpack.c.bf16 %v424, %v421
        %v633 = vpack.c.bf16 %v432, %v429
        %v634 = vpack.c.bf16 %v440, %v437
        %v635 = vpack.c.bf16 %v448, %v445
        %v652 = vunpack.c.l.b16 %v612
        %v653 = vunpack.c.l.b16 %v613
        %v654 = vunpack.c.l.b16 %v614
        %v655 = vunpack.c.l.b16 %v615
        %v656 = vunpack.c.l.b16 %v616
        %v657 = vunpack.c.l.b16 %v617
        %v658 = vunpack.c.l.b16 %v618
        %v659 = vunpack.c.l.b16 %v619
        %v660 = vunpack.c.l.b16 %v620
        %v661 = vunpack.c.l.b16 %v621
        %v662 = vunpack.c.l.b16 %v622
        %v663 = vunpack.c.l.b16 %v623
        %v664 = vunpack.c.l.b16 %v624
        %v665 = vunpack.c.l.b16 %v625
        %v666 = vunpack.c.l.b16 %v626
        %v667 = vunpack.c.l.b16 %v627
        %v668 = vpack.c.b16 %v653, %v652
        %v669 = vpack.c.b16 %v655, %v654
        %v670 = vpack.c.b16 %v657, %v656
        %v671 = vpack.c.b16 %v659, %v658
        %v672 = vpack.c.b16 %v661, %v660
        %v673 = vpack.c.b16 %v663, %v662
        %v674 = vpack.c.b16 %v665, %v664
        %v675 = vpack.c.b16 %v667, %v666
        %684 = vmatprep.subr.bf16.mxu0 0
        %685 = vmatpush1.bf16.msra.mxu0 %v635
        %686 = vmatprep.subr.bf16.mxu0 0
        %687 = vmatpush1.bf16.msra.mxu0 %v634
        %688 = vmatprep.subr.bf16.mxu0 0
        %689 = vmatpush1.bf16.msra.mxu0 %v633
        %690 = vmatprep.subr.bf16.mxu0 0
        %691 = vmatpush1.bf16.msra.mxu0 %v632
        %692 = vmatprep.subr.bf16.mxu0 0
        %693 = vmatpush1.bf16.msra.mxu0 %v631
        %694 = vmatprep.subr.bf16.mxu0 0
        %695 = vmatpush1.bf16.msra.mxu0 %v630
        %696 = vmatprep.subr.bf16.mxu0 0
        %697 = vmatpush1.bf16.msra.mxu0 %v629
        %698 = vmatprep.subr.bf16.mxu0 0
        %699 = vmatpush1.bf16.msra.mxu0 %v628
        %700 = vmatprep.subr.bf16.mxu0 0
        %701 = vmatpush2.bf16.msra.mxu0 0
        %702 = vmatprep.subr.bf16.mxu0 0
        %703 = vmatpush2.bf16.msra.mxu0 0
        %704 = vmatprep.subr.bf16.mxu0 0
        %705 = vmatpush2.bf16.msra.mxu0 0
        %706 = vmatprep.subr.bf16.mxu0 0
        %707 = vmatpush2.bf16.msra.mxu0 0
        %708 = vmatprep.subr.bf16.mxu0 0
        %709 = vmatpush2.bf16.msra.mxu0 0
        %710 = vmatprep.subr.bf16.mxu0 0
        %711 = vmatpush2.bf16.msra.mxu0 0
        %712 = vmatprep.subr.bf16.mxu0 0
        %713 = vmatpush2.bf16.msra.mxu0 0
        %714 = vmatprep.subr.bf16.mxu0 0
        %715 = vmatpush2.bf16.msra.mxu0 0
        %716 = vmatprep.mubr.bf16.mxu0 0
        %717 = vmatmul.mubr.bf16.gmra.mxu0 %v668
        %v718 = vpop.f32.mrf.mxu0
        %v719 = vadd.f32 %v550, %v718
        %v720 = vpop.f32.mrf.mxu0
        %v721 = vpop.f32.mrf.mxu0
        %v722 = vadd.f32 %v553, %v721
        %v723 = vpop.f32.mrf.mxu0
        %724 = vmatprep.mubr.bf16.mxu0 0
        %725 = vmatmul.mubr.bf16.gmra.mxu0 %v669
        %v726 = vpop.f32.mrf.mxu0
        %v727 = vadd.f32 %v558, %v726
        %v728 = vpop.f32.mrf.mxu0
        %v729 = vpop.f32.mrf.mxu0
        %v730 = vadd.f32 %v561, %v729
        %v731 = vpop.f32.mrf.mxu0
        %732 = vmatprep.mubr.bf16.mxu0 0
        %733 = vmatmul.mubr.bf16.gmra.mxu0 %v670
        %v734 = vpop.f32.mrf.mxu0
        %v735 = vadd.f32 %v566, %v734
        %v736 = vpop.f32.mrf.mxu0
        %v737 = vpop.f32.mrf.mxu0
        %v738 = vadd.f32 %v569, %v737
        %v739 = vpop.f32.mrf.mxu0
        %740 = vmatprep.mubr.bf16.mxu0 0
        %741 = vmatmul.mubr.bf16.gmra.mxu0 %v671
        %v742 = vpop.f32.mrf.mxu0
        %v743 = vadd.f32 %v574, %v742
        %v744 = vpop.f32.mrf.mxu0
        %v745 = vpop.f32.mrf.mxu0
        %v746 = vadd.f32 %v577, %v745
        %v747 = vpop.f32.mrf.mxu0
        %748 = vmatprep.mubr.bf16.mxu0 0
        %749 = vmatmul.mubr.bf16.gmra.mxu0 %v672
        %v750 = vpop.f32.mrf.mxu0
        %v751 = vadd.f32 %v582, %v750
        %v752 = vpop.f32.mrf.mxu0
        %v753 = vpop.f32.mrf.mxu0
        %v754 = vadd.f32 %v585, %v753
        %v755 = vpop.f32.mrf.mxu0
        %756 = vmatprep.mubr.bf16.mxu0 0
        %757 = vmatmul.mubr.bf16.gmra.mxu0 %v673
        %v758 = vpop.f32.mrf.mxu0
        %v759 = vadd.f32 %v590, %v758
        %v760 = vpop.f32.mrf.mxu0
        %v761 = vpop.f32.mrf.mxu0
        %v762 = vadd.f32 %v593, %v761
        %v763 = vpop.f32.mrf.mxu0
        %764 = vmatprep.mubr.bf16.mxu0 0
        %765 = vmatmul.mubr.bf16.gmra.mxu0 %v674
        %v766 = vpop.f32.mrf.mxu0
        %v767 = vadd.f32 %v598, %v766
        %v768 = vpop.f32.mrf.mxu0
        %v769 = vpop.f32.mrf.mxu0
        %v770 = vadd.f32 %v601, %v769
        %v771 = vpop.f32.mrf.mxu0
        %772 = vmatprep.mubr.bf16.mxu0 0
        %773 = vmatmul.mubr.bf16.gmra.mxu0 %v675
        %v774 = vpop.f32.mrf.mxu0
        %v775 = vadd.f32 %v606, %v774
        %v776 = vpop.f32.mrf.mxu0
        %v777 = vpop.f32.mrf.mxu0
        %v778 = vadd.f32 %v609, %v777
        %v779 = vpop.f32.mrf.mxu0
        %780 = vdwg.mxu0
        %p781 = scmp.lt.s32.totalorder %s22, 2
        // Predicated region
        $region49: #{tpu_custom_call.1} parent=27 // pred_check
          %p782 = pneg %p781
        $region50: #{tpu_custom_call.1} parent=27 // pred_check_branch
          %784 = sbr.rel (%p782) target = $region52
        $region51: #{tpu_custom_call.1} parent=27 // pred_region
          %v785 = vmax.f32 %v719, 0.0
          %v786 = vmax.f32 %v722, 0.0
          %v787 = vmax.f32 %v727, 0.0
          %v788 = vmax.f32 %v730, 0.0
          %v789 = vmax.f32 %v735, 0.0
          %v790 = vmax.f32 %v738, 0.0
          %v791 = vmax.f32 %v743, 0.0
          %v792 = vmax.f32 %v746, 0.0
          %v793 = vmax.f32 %v751, 0.0
          %v794 = vmax.f32 %v754, 0.0
          %v795 = vmax.f32 %v759, 0.0
          %v796 = vmax.f32 %v762, 0.0
          %v797 = vmax.f32 %v767, 0.0
          %v798 = vmax.f32 %v770, 0.0
          %v799 = vmax.f32 %v775, 0.0
          %v800 = vmax.f32 %v778, 0.0
          %v801 = vpack.c.bf16 %v786, %v785
          %v802 = vpack.c.bf16 %v788, %v787
          %v803 = vpack.c.bf16 %v790, %v789
          %v804 = vpack.c.bf16 %v792, %v791
          %v805 = vpack.c.bf16 %v794, %v793
          %v806 = vpack.c.bf16 %v796, %v795
          %v807 = vpack.c.bf16 %v798, %v797
          %v808 = vpack.c.bf16 %v800, %v799
          %v817 = vunpack.c.l.b16 %v801
          %v818 = vunpack.c.h.b16 %v801
          %v819 = vunpack.c.l.b16 %v802
          %v820 = vunpack.c.h.b16 %v802
          %v821 = vunpack.c.l.b16 %v803
          %v822 = vunpack.c.h.b16 %v803
          %v823 = vunpack.c.l.b16 %v804
          %v824 = vunpack.c.h.b16 %v804
          %v825 = vunpack.c.l.b16 %v805
          %v826 = vunpack.c.h.b16 %v805
          %v827 = vunpack.c.l.b16 %v806
          %v828 = vunpack.c.h.b16 %v806
          %v829 = vunpack.c.l.b16 %v807
          %v830 = vunpack.c.h.b16 %v807
          %v831 = vunpack.c.l.b16 %v808
          %v832 = vunpack.c.h.b16 %v808
          %v833 = vpack.c.b16 %v817, %v817
          %v834 = vpack.c.b16 %v818, %v818
          %v835 = vpack.c.b16 %v819, %v819
          %v836 = vpack.c.b16 %v820, %v820
          %v837 = vpack.c.b16 %v821, %v821
          %v838 = vpack.c.b16 %v822, %v822
          %v839 = vpack.c.b16 %v823, %v823
          %v840 = vpack.c.b16 %v824, %v824
          %v841 = vpack.c.b16 %v825, %v825
          %v842 = vpack.c.b16 %v826, %v826
          %v843 = vpack.c.b16 %v827, %v827
          %v844 = vpack.c.b16 %v828, %v828
          %v845 = vpack.c.b16 %v829, %v829
          %v846 = vpack.c.b16 %v830, %v830
          %v847 = vpack.c.b16 %v831, %v831
          %v848 = vpack.c.b16 %v832, %v832
          %865 = vst [vmem:[#allocation3] sm:$0xf] %v833
          %866 = vst [vmem:[#allocation3 + $0x4] sm:$0xf] %v834
          %867 = vst [vmem:[#allocation3 + $0x8] sm:$0xf] %v835
          %868 = vst [vmem:[#allocation3 + $0xc] sm:$0xf] %v836
          %869 = vst [vmem:[#allocation3 + $0x10] sm:$0xf] %v837
          %870 = vst [vmem:[#allocation3 + $0x14] sm:$0xf] %v838
          %871 = vst [vmem:[#allocation3 + $0x18] sm:$0xf] %v839
          %872 = vst [vmem:[#allocation3 + $0x1c] sm:$0xf] %v840
          %873 = vst [vmem:[#allocation3 + $0x20] sm:$0xf] %v841
          %874 = vst [vmem:[#allocation3 + $0x24] sm:$0xf] %v842
          %875 = vst [vmem:[#allocation3 + $0x28] sm:$0xf] %v843
          %876 = vst [vmem:[#allocation3 + $0x2c] sm:$0xf] %v844
          %877 = vst [vmem:[#allocation3 + $0x30] sm:$0xf] %v845
          %878 = vst [vmem:[#allocation3 + $0x34] sm:$0xf] %v846
          %879 = vst [vmem:[#allocation3 + $0x38] sm:$0xf] %v847
          %880 = vst [vmem:[#allocation3 + $0x3c] sm:$0xf] %v848
        $region52: #{tpu_custom_call.1} parent=27 // pred_fallthru
          _
        %p881 = scmp.eq.s32.totalorder %s22, 2
        // Predicated region
        $region53: #{tpu_custom_call.1} parent=27 // pred_check
          %p882 = pneg %p881
        $region54: #{tpu_custom_call.1} parent=27 // pred_check_branch
          %884 = sbr.rel (%p882) target = $region56
        $region55: #{tpu_custom_call.1} parent=27 // pred_region
          %v885 = vpack.c.bf16 %v722, %v719
          %v886 = vpack.c.bf16 %v730, %v727
          %v887 = vpack.c.bf16 %v738, %v735
          %v888 = vpack.c.bf16 %v746, %v743
          %v889 = vpack.c.bf16 %v754, %v751
          %v890 = vpack.c.bf16 %v762, %v759
          %v891 = vpack.c.bf16 %v770, %v767
          %v892 = vpack.c.bf16 %v778, %v775
          %v901 = vunpack.c.l.b16 %v885
          %v902 = vunpack.c.h.b16 %v885
          %v903 = vunpack.c.l.b16 %v886
          %v904 = vunpack.c.h.b16 %v886
          %v905 = vunpack.c.l.b16 %v887
          %v906 = vunpack.c.h.b16 %v887
          %v907 = vunpack.c.l.b16 %v888
          %v908 = vunpack.c.h.b16 %v888
          %v909 = vunpack.c.l.b16 %v889
          %v910 = vunpack.c.h.b16 %v889
          %v911 = vunpack.c.l.b16 %v890
          %v912 = vunpack.c.h.b16 %v890
          %v913 = vunpack.c.l.b16 %v891
          %v914 = vunpack.c.h.b16 %v891
          %v915 = vunpack.c.l.b16 %v892
          %v916 = vunpack.c.h.b16 %v892
          %v917 = vpack.c.b16 %v901, %v901
          %v918 = vpack.c.b16 %v902, %v902
          %v919 = vpack.c.b16 %v903, %v903
          %v920 = vpack.c.b16 %v904, %v904
          %v921 = vpack.c.b16 %v905, %v905
          %v922 = vpack.c.b16 %v906, %v906
          %v923 = vpack.c.b16 %v907, %v907
          %v924 = vpack.c.b16 %v908, %v908
          %v925 = vpack.c.b16 %v909, %v909
          %v926 = vpack.c.b16 %v910, %v910
          %v927 = vpack.c.b16 %v911, %v911
          %v928 = vpack.c.b16 %v912, %v912
          %v929 = vpack.c.b16 %v913, %v913
          %v930 = vpack.c.b16 %v914, %v914
          %v931 = vpack.c.b16 %v915, %v915
          %v932 = vpack.c.b16 %v916, %v916
          %949 = vst [vmem:[#allocation10] sm:$0xf] %v917
          %950 = vst [vmem:[#allocation10 + $0x4] sm:$0xf] %v918
          %951 = vst [vmem:[#allocation10 + $0x8] sm:$0xf] %v919
          %952 = vst [vmem:[#allocation10 + $0xc] sm:$0xf] %v920
          %953 = vst [vmem:[#allocation10 + $0x10] sm:$0xf] %v921
          %954 = vst [vmem:[#allocation10 + $0x14] sm:$0xf] %v922
          %955 = vst [vmem:[#allocation10 + $0x18] sm:$0xf] %v923
          %956 = vst [vmem:[#allocation10 + $0x1c] sm:$0xf] %v924
          %957 = vst [vmem:[#allocation10 + $0x20] sm:$0xf] %v925
          %958 = vst [vmem:[#allocation10 + $0x24] sm:$0xf] %v926
          %959 = vst [vmem:[#allocation10 + $0x28] sm:$0xf] %v927
          %960 = vst [vmem:[#allocation10 + $0x2c] sm:$0xf] %v928
          %961 = vst [vmem:[#allocation10 + $0x30] sm:$0xf] %v929
          %962 = vst [vmem:[#allocation10 + $0x34] sm:$0xf] %v930
          %963 = vst [vmem:[#allocation10 + $0x38] sm:$0xf] %v931
          %964 = vst [vmem:[#allocation10 + $0x3c] sm:$0xf] %v932
        $region56: #{tpu_custom_call.1} parent=27 // pred_fallthru
          _
        // Predicated region
        $region57: #{tpu_custom_call.1} parent=27 // pred_check
          %p965 = pneg %p87
        $region58: #{tpu_custom_call.1} parent=27 // pred_check_branch
          %967 = sbr.rel (%p965) target = $region60
        $region59: #{tpu_custom_call.1} parent=27 // pred_region
          %s969 = ssub.s32 1024, 1024
          %970 = vsyncadd [#allocation7], %s969
          %s971 = sshll.u32 [#allocation10], 4
          %s972 = int_to_ptr.vmem [resolvable:$true] %s971
          %977 = dma.vmem_to_hbm [thread:$0]  %s972, 1024, %s4, [#allocation7], 64, 64, 4
        $region60: #{tpu_custom_call.1} parent=27 // pred_fallthru
          _
        // Predicated region
        $region61: #{tpu_custom_call.1} parent=27 // pred_check
          %p978 = pneg %p87
        $region62: #{tpu_custom_call.1} parent=27 // pred_check_branch
          %980 = sbr.rel (%p978) target = $region64
        $region63: #{tpu_custom_call.1} parent=27 // pred_region
          %981 = dma.done [#allocation7], 1024
        $region64: #{tpu_custom_call.1} parent=27 // pred_fallthru
          _
      $region28: #{tpu_custom_call.1} parent=5 // pred_fallthru
        _
      %p982 = scmp.le.s32.totalorder 2, %s17
      // Predicated region
      $region65: #{tpu_custom_call.1} parent=5 // pred_check
        %p983 = pneg %p982
      $region66: #{tpu_custom_call.1} parent=5 // pred_check_branch
        %985 = sbr.rel (%p983) target = $region68
      $region67: #{tpu_custom_call.1} parent=5 // pred_region
        %s986 = ssub.s32 %s17, 2
      $region68: #{tpu_custom_call.1} parent=5 // pred_fallthru
        _
    $region6: #{tpu_custom_call.1} parent=1 // loop_footer
      %s21 = sadd.s32 1, %s17
    $region7: #{tpu_custom_call.1} parent=1 // loop_footer_branch
      %16 = sbr.rel target = $region3
    $region8: #{tpu_custom_call.1} parent=1 // loop_exit
      _
    %987 = vsyncpa [#allocation6], 1
    %s988 = scalar_lea.sflag [#allocation6], 1
    %989 = vsyncpa %s988, 1
    %990 = vsyncpa [#allocation9], 1
    %s991 = scalar_lea.sflag [#allocation9], 1
    %992 = vsyncpa %s991, 1
    %993 = vsyncpa [#allocation7], 1
    %s994 = scalar_lea.sflag [#allocation7], 1
    %995 = vsyncpa %s994, 1
  %996 = vsyncmov [#allocation4]
  %s997 = vpop.sfrf %996
  %p998 = scmp.eq.s32.totalorder %s997, 0
  %p999 = pneg %p998
  %1001 = shalt.err (%p999)
  %s1002 = scalar_lea.sflag [#allocation4], 1
  %1003 = vsyncmov %s1002
  %s1004 = vpop.sfrf %1003
  %p1005 = scmp.eq.s32.totalorder %s1004, 0
  %p1006 = pneg %p1005
  %1008 = shalt.err (%p1006)

</llo_original>
